<compile_context>
chip_gen: v7x
topology: tpu7x:2x2x1
jax: 0.10.0
libtpu: 0.0.40
codegen_flags: <defaults>
</compile_context>

<pallas_src>
import functools

import jax
import jax.numpy as jnp
from jax.experimental import pallas as pl
from jax.experimental.pallas import tpu as pltpu

N_PAD = 128  # lane-dense padded output width


def final_net_kernel(x_ref, w1_ref, b1_ref, w2_ref, b2_ref, o_ref):
    # fc1: (TB, len_ip) @ (len_ip, inter_dim) + (1, inter_dim)
    h = jnp.dot(x_ref[...], w1_ref[...], preferred_element_type=jnp.float32)
    h = jnp.maximum(h + b1_ref[...], 0.0)  # ReLU
    # Dropout with training=False (eval) is the identity.
    # TODO(synk): training-mode dropout (Bernoulli mask via pltpu.prng_random_bits)
    # not implemented; inference semantics reproduced exactly.
    # fc2: (TB, inter_dim) @ (inter_dim, N_PAD) + (1, N_PAD)
    logits = jnp.dot(h, w2_ref[...], preferred_element_type=jnp.float32)
    logits = logits + b2_ref[...]
    o_ref[...] = jax.nn.sigmoid(logits).astype(o_ref.dtype)


def _round_up(x, m):
    return (x + m - 1) // m * m


@functools.partial(jax.jit, static_argnames=("block_b",))
def final_net_forward(x, w1, b1, w2, b2, *, block_b=512):
    B, len_ip = x.shape
    inter_dim = w1.shape[1]
    num_classes = w2.shape[1]

    # Batch tile: multiple of 8 sublanes, capped at block_b.
    TB = min(block_b, _round_up(B, 8))
    B_pad = _round_up(B, TB)
    if B_pad != B:
        x = jnp.pad(x, ((0, B_pad - B), (0, 0)))

    # Lane-dense output: zero-pad classes 6 -> 128 in weights/bias.
    w2p = jnp.pad(w2, ((0, 0), (0, N_PAD - num_classes)))
    b2p = jnp.pad(b2, ((0, 0), (0, N_PAD - num_classes)))

    grid = (B_pad // TB,)

    flops = 2 * B_pad * (len_ip * inter_dim + inter_dim * N_PAD)
    bytes_accessed = 4 * (
        B_pad * len_ip + B_pad * N_PAD
        + len_ip * inter_dim + inter_dim
        + inter_dim * N_PAD + N_PAD
    )
    cost = pl.CostEstimate(
        flops=flops,
        transcendentals=B_pad * N_PAD,
        bytes_accessed=bytes_accessed,
    )

    out = pl.pallas_call(
        final_net_kernel,
        out_shape=jax.ShapeDtypeStruct((B_pad, N_PAD), jnp.float32),
        grid=grid,
        in_specs=[
            pl.BlockSpec((TB, len_ip), lambda i: (i, 0)),          # x: tiled on batch
            pl.BlockSpec((len_ip, inter_dim), lambda i: (0, 0)),   # w1: VMEM-resident
            pl.BlockSpec((1, inter_dim), lambda i: (0, 0)),        # b1: VMEM-resident
            pl.BlockSpec((inter_dim, N_PAD), lambda i: (0, 0)),    # w2 (padded): resident
            pl.BlockSpec((1, N_PAD), lambda i: (0, 0)),            # b2 (padded): resident
        ],
        out_specs=pl.BlockSpec((TB, N_PAD), lambda i: (i, 0)),
        compiler_params=pltpu.CompilerParams(
            dimension_semantics=("parallel",),
        ),
        cost_estimate=cost,
    )(x, w1, b1, w2p, b2p)

    # Strip batch padding and the padded (constant 0.5) class columns.
    return out[:B, :num_classes]


def init_params(key, len_ip=160, inter_dim=32, num_classes=6):
    """Deterministic parameter init (PyTorch nn.Linear-style uniform bounds)."""
    k1, k2, k3, k4 = jax.random.split(key, 4)
    bound1 = 1.0 / jnp.sqrt(len_ip)
    bound2 = 1.0 / jnp.sqrt(inter_dim)
    # Stored already transposed relative to PyTorch's (out, in) convention.
    w1 = jax.random.uniform(k1, (len_ip, inter_dim), jnp.float32, -bound1, bound1)
    b1 = jax.random.uniform(k2, (1, inter_dim), jnp.float32, -bound1, bound1)
    w2 = jax.random.uniform(k3, (inter_dim, num_classes), jnp.float32, -bound2, bound2)
    b2 = jax.random.uniform(k4, (1, num_classes), jnp.float32, -bound2, bound2)
    return w1, b1, w2, b2


def _reference(x, w1, b1, w2, b2):
    return jax.nn.sigmoid(jnp.maximum(x @ w1 + b1, 0.0) @ w2 + b2)


if __name__ == "__main__":
    len_ip, inter_dim, num_classes = 160, 32, 6

    key = jax.random.PRNGKey(0)
    k_x, k_x2, k_p = jax.random.split(key, 3)
    w1, b1, w2, b2 = init_params(k_p, len_ip, inter_dim, num_classes)

    # Small batch (single grid step).
    batch = 8
    x = jax.random.normal(k_x, (batch, len_ip), jnp.float32)
    out = jax.block_until_ready(final_net_forward(x, w1, b1, w2, b2))
    ref = _reference(x, w1, b1, w2, b2)
    assert out.shape == (batch, num_classes)
    assert jnp.allclose(out, ref, atol=1e-5, rtol=1e-5)

    # Ragged larger batch to exercise the batch grid + padding path.
    batch2 = 1000
    x2 = jax.random.normal(k_x2, (batch2, len_ip), jnp.float32)
    out2 = jax.block_until_ready(final_net_forward(x2, w1, b1, w2, b2, block_b=256))
    ref2 = _reference(x2, w1, b1, w2, b2)
    assert out2.shape == (batch2, num_classes)
    assert jnp.allclose(out2, ref2, atol=1e-5, rtol=1e-5)

    print("KERNEL_OK")
</pallas_src>

<mosaic_0001>
module attributes {stable_mosaic.version = 11 : i64} {
  func.func @final_net_kernel(%arg0: i32, %arg1: memref<8x160xf32, #tpu.memory_space<vmem>>, %arg2: memref<160x32xf32, #tpu.memory_space<vmem>>, %arg3: memref<1x32xf32, #tpu.memory_space<vmem>>, %arg4: memref<32x128xf32, #tpu.memory_space<vmem>>, %arg5: memref<1x128xf32, #tpu.memory_space<vmem>>, %arg6: memref<8x128xf32, #tpu.memory_space<vmem>>) attributes {dimension_semantics = [#tpu.dimension_semantics<parallel>], iteration_bounds = array<i64: 1>, scalar_prefetch = 0 : i64, scratch_operands = 0 : i64, tpu.core_type = #tpu.core_type<tc>, window_params = [{transform_indices = @transform_0, window_bounds = array<i64: 8, 160>}, {pipeline_mode = #tpu.pipeline_mode<synchronous>, transform_indices = @transform_1, window_bounds = array<i64: 160, 32>}, {pipeline_mode = #tpu.pipeline_mode<synchronous>, transform_indices = @transform_2, window_bounds = array<i64: 1, 32>}, {pipeline_mode = #tpu.pipeline_mode<synchronous>, transform_indices = @transform_3, window_bounds = array<i64: 32, 128>}, {pipeline_mode = #tpu.pipeline_mode<synchronous>, transform_indices = @transform_4, window_bounds = array<i64: 1, 128>}, {transform_indices = @transform_5, window_bounds = array<i64: 8, 128>}]} {
    %c0 = arith.constant 0 : index
    %c0_0 = arith.constant 0 : index
    %0 = vector.load %arg1[%c0, %c0_0] : memref<8x160xf32, #tpu.memory_space<vmem>>, vector<8x160xf32>
    %c0_1 = arith.constant 0 : index
    %c0_2 = arith.constant 0 : index
    %1 = vector.load %arg2[%c0_1, %c0_2] : memref<160x32xf32, #tpu.memory_space<vmem>>, vector<160x32xf32>
    %cst = arith.constant dense<0.000000e+00> : vector<8x32xf32>
    %2 = tpu.matmul %0, %1, %cst {dimension_numbers = #tpu.dot_dimension_numbers<[1], [0], [0], [1], [0, 0, 1, 1], [], []>} : vector<8x160xf32>, vector<160x32xf32>, vector<8x32xf32> -> vector<8x32xf32>
    %c0_3 = arith.constant 0 : index
    %c0_4 = arith.constant 0 : index
    %3 = vector.load %arg3[%c0_3, %c0_4] : memref<1x32xf32, #tpu.memory_space<vmem>>, vector<1x32xf32>
    %4 = vector.broadcast %3 : vector<1x32xf32> to vector<8x32xf32>
    %5 = arith.addf %2, %4 : vector<8x32xf32>
    %cst_5 = arith.constant 0.000000e+00 : f32
    %6 = vector.broadcast %cst_5 : f32 to vector<8x32xf32>
    %7 = arith.maximumf %5, %6 : vector<8x32xf32>
    %c0_6 = arith.constant 0 : index
    %c0_7 = arith.constant 0 : index
    %8 = vector.load %arg4[%c0_6, %c0_7] : memref<32x128xf32, #tpu.memory_space<vmem>>, vector<32x128xf32>
    %cst_8 = arith.constant dense<0.000000e+00> : vector<8x128xf32>
    %9 = tpu.matmul %7, %8, %cst_8 {dimension_numbers = #tpu.dot_dimension_numbers<[1], [0], [0], [1], [0, 0, 1, 1], [], []>} : vector<8x32xf32>, vector<32x128xf32>, vector<8x128xf32> -> vector<8x128xf32>
    %c0_9 = arith.constant 0 : index
    %c0_10 = arith.constant 0 : index
    %10 = vector.load %arg5[%c0_9, %c0_10] : memref<1x128xf32, #tpu.memory_space<vmem>>, vector<1x128xf32>
    %11 = vector.broadcast %10 : vector<1x128xf32> to vector<8x128xf32>
    %12 = arith.addf %9, %11 : vector<8x128xf32>
    %13 = arith.negf %12 : vector<8x128xf32>
    %14 = math.exp %13 : vector<8x128xf32>
    %cst_11 = arith.constant 1.000000e+00 : f32
    %15 = vector.broadcast %cst_11 : f32 to vector<8x128xf32>
    %16 = arith.addf %15, %14 : vector<8x128xf32>
    %17 = arith.divf %15, %16 : vector<8x128xf32>
    %c0_12 = arith.constant 0 : index
    %c0_13 = arith.constant 0 : index
    %18 = vector.load %arg6[%c0_12, %c0_13] : memref<8x128xf32, #tpu.memory_space<vmem>>, vector<8x128xf32>
    tpu.vector_store %arg6[%c0_12, %c0_13], %17 {strides = array<i32>} : memref<8x128xf32, #tpu.memory_space<vmem>>, vector<8x128xf32>,
    return
  }
  func.func @transform_0(%arg0: i32) -> (i32, i32) {
    %c0_i32 = arith.constant 0 : i32
    %c0_i32_0 = arith.constant 0 : i32
    return %arg0, %c0_i32 : i32, i32
  }
  func.func @transform_1(%arg0: i32) -> (i32, i32) {
    %c0_i32 = arith.constant 0 : i32
    %c0_i32_0 = arith.constant 0 : i32
    %c0_i32_1 = arith.constant 0 : i32
    return %c0_i32, %c0_i32_0 : i32, i32
  }
  func.func @transform_2(%arg0: i32) -> (i32, i32) {
    %c0_i32 = arith.constant 0 : i32
    %c0_i32_0 = arith.constant 0 : i32
    %c0_i32_1 = arith.constant 0 : i32
    return %c0_i32, %c0_i32_0 : i32, i32
  }
  func.func @transform_3(%arg0: i32) -> (i32, i32) {
    %c0_i32 = arith.constant 0 : i32
    %c0_i32_0 = arith.constant 0 : i32
    %c0_i32_1 = arith.constant 0 : i32
    return %c0_i32, %c0_i32_0 : i32, i32
  }
  func.func @transform_4(%arg0: i32) -> (i32, i32) {
    %c0_i32 = arith.constant 0 : i32
    %c0_i32_0 = arith.constant 0 : i32
    %c0_i32_1 = arith.constant 0 : i32
    return %c0_i32, %c0_i32_0 : i32, i32
  }
  func.func @transform_5(%arg0: i32) -> (i32, i32) {
    %c0_i32 = arith.constant 0 : i32
    %c0_i32_0 = arith.constant 0 : i32
    return %arg0, %c0_i32 : i32, i32
  }
}

</mosaic_0001>

<llo_original>
// kernel: final_net_forward.1
$region0: #{final_net_forward.1}
  #allocation0 [shape = 'u32[]', space=smem, size = 0x4, offset = 0x4, fixed_abs, tag = 'smem constant byte address 0x4 - core index']
  #allocation1 [shape = 'u32[144,128]{1,0:T(1,128)}', space=vmem, size = 0x12000, scoped, tag = 'internal scratch']
  %s0 = inlined_call_operand.vmem [shape: f32[8,160], index: 0, kind: input, shape index: {}]
  %s1 = inlined_call_operand.vmem [shape: f32[160,32], index: 1, kind: input, shape index: {}]
  %s2 = inlined_call_operand.vmem [shape: f32[1,32], index: 2, kind: input, shape index: {}]
  %s3 = inlined_call_operand.vmem [shape: f32[32,128], index: 3, kind: input, shape index: {}]
  %s4 = inlined_call_operand.vmem [shape: f32[1,128], index: 4, kind: input, shape index: {}]
  %s5 = inlined_call_operand.hbm [shape: f32[8,128], index: 5, kind: output, shape index: {}]
  %s6 = sld [smem:[#allocation0]]
  $region30: #{final_net_forward.1} parent=0
    _
  %s8 = ssub.s32 1, %s6
  %s9 = scalar_select 0, %s8, %s6
  $region1: #{final_net_forward.1} parent=0
    #allocation2 [shape = 'u8[4096]{0}', space=vmem, size = 0x1000, scoped, tag = 'output window, operand 0, single buffered']
    #allocation3 [shape = 's32[1]{0}', space=sflag, size = 0x4, scoped, tag = 'scoped memory for final_net_forward.1']
    %10 = vsyncpa [#allocation3], 0
    // Predicated region
    $region2: #{final_net_forward.1} parent=1 // pred_check
      _
    $region3: #{final_net_forward.1} parent=1 // pred_check_branch
      %12 = sbr.rel (0) target = $region5
    $region4: #{final_net_forward.1} parent=1 // pred_region
      _
    $region5: #{final_net_forward.1} parent=1 // pred_fallthru
      _
    // Predicated region
    $region6: #{final_net_forward.1} parent=1 // pred_check
      _
    $region7: #{final_net_forward.1} parent=1 // pred_check_branch
      %14 = sbr.rel (0) target = $region9
    $region8: #{final_net_forward.1} parent=1 // pred_region
      _
    $region9: #{final_net_forward.1} parent=1 // pred_fallthru
      _
    // Predicated region
    $region10: #{final_net_forward.1} parent=1 // pred_check
      _
    $region11: #{final_net_forward.1} parent=1 // pred_check_branch
      %16 = sbr.rel (0) target = $region13
    $region12: #{final_net_forward.1} parent=1 // pred_region
      _
    $region13: #{final_net_forward.1} parent=1 // pred_fallthru
      _
    // Predicated region
    $region14: #{final_net_forward.1} parent=1 // pred_check
      _
    $region15: #{final_net_forward.1} parent=1 // pred_check_branch
      %18 = sbr.rel (0) target = $region17
    $region16: #{final_net_forward.1} parent=1 // pred_region
      _
    $region17: #{final_net_forward.1} parent=1 // pred_fallthru
      _
    // Predicated region
    $region18: #{final_net_forward.1} parent=1 // pred_check
      _
    $region19: #{final_net_forward.1} parent=1 // pred_check_branch
      %20 = sbr.rel (0) target = $region21
    $region20: #{final_net_forward.1} parent=1 // pred_region
      _
    $region21: #{final_net_forward.1} parent=1 // pred_fallthru
      _
    %v21 = vld [vmem:[%s0] sm:$0xff]
    %v22 = vld [vmem:[%s0 + $0x8] sm:$0xff]
    %v23 = vld [vmem:[%s1] sm:$0xff]
    %v24 = vld [vmem:[%s1 + $0x8] sm:$0xff]
    %v25 = vld [vmem:[%s1 + $0x10] sm:$0xff]
    %v26 = vld [vmem:[%s1 + $0x18] sm:$0xff]
    %v27 = vld [vmem:[%s1 + $0x20] sm:$0xff]
    %v28 = vld [vmem:[%s1 + $0x28] sm:$0xff]
    %v29 = vld [vmem:[%s1 + $0x30] sm:$0xff]
    %v30 = vld [vmem:[%s1 + $0x38] sm:$0xff]
    %v31 = vld [vmem:[%s1 + $0x40] sm:$0xff]
    %v32 = vld [vmem:[%s1 + $0x48] sm:$0xff]
    %v33 = vld [vmem:[%s1 + $0x50] sm:$0xff]
    %v34 = vld [vmem:[%s1 + $0x58] sm:$0xff]
    %v35 = vld [vmem:[%s1 + $0x60] sm:$0xff]
    %v36 = vld [vmem:[%s1 + $0x68] sm:$0xff]
    %v37 = vld [vmem:[%s1 + $0x70] sm:$0xff]
    %v38 = vld [vmem:[%s1 + $0x78] sm:$0xff]
    %v39 = vld [vmem:[%s1 + $0x80] sm:$0xff]
    %v40 = vld [vmem:[%s1 + $0x88] sm:$0xff]
    %v41 = vld [vmem:[%s1 + $0x90] sm:$0xff]
    %v42 = vld [vmem:[%s1 + $0x98] sm:$0xff]
    %v43 = vld [vmem:[%s2] sm:$0x1]
    %v45 = vlaneseq
    %v46 = vshrl.u32 %v45, 7
    %v47 = vsub.s32 0, %v46
    %v48 = vrot.slane %v43, %v47
    %vm50 = vcmask 261120
    %v52 = vsel %vm50, %v22, 0
    %54 = vmatprep.subr.mxu0 0.0
    %55 = vmatpush1.msra.mxu0 %v23
    %56 = vmatprep.subr.mxu0 0.0
    %57 = vmatpush1.msra.mxu0 %v24
    %58 = vmatprep.subr.mxu0 0.0
    %59 = vmatpush1.msra.mxu0 %v25
    %60 = vmatprep.subr.mxu0 0.0
    %61 = vmatpush1.msra.mxu0 %v26
    %62 = vmatprep.subr.mxu0 0.0
    %63 = vmatpush1.msra.mxu0 %v27
    %64 = vmatprep.subr.mxu0 0.0
    %65 = vmatpush1.msra.mxu0 %v28
    %66 = vmatprep.subr.mxu0 0.0
    %67 = vmatpush1.msra.mxu0 %v29
    %68 = vmatprep.subr.mxu0 0.0
    %69 = vmatpush1.msra.mxu0 %v30
    %70 = vmatprep.subr.mxu0 0.0
    %71 = vmatpush1.msra.mxu0 %v31
    %72 = vmatprep.subr.mxu0 0.0
    %73 = vmatpush1.msra.mxu0 %v32
    %74 = vmatprep.subr.mxu0 0.0
    %75 = vmatpush1.msra.mxu0 %v33
    %76 = vmatprep.subr.mxu0 0.0
    %77 = vmatpush1.msra.mxu0 %v34
    %78 = vmatprep.subr.mxu0 0.0
    %79 = vmatpush1.msra.mxu0 %v35
    %80 = vmatprep.subr.mxu0 0.0
    %81 = vmatpush1.msra.mxu0 %v36
    %82 = vmatprep.subr.mxu0 0.0
    %83 = vmatpush1.msra.mxu0 %v37
    %84 = vmatprep.subr.mxu0 0.0
    %85 = vmatpush1.msra.mxu0 %v38
    %86 = vmatprep.subr.mxu0 0.0
    %87 = vmatpush1.msra.mxu0 %v39
    %88 = vmatprep.subr.mxu0 0.0
    %89 = vmatpush1.msra.mxu0 %v40
    %90 = vmatprep.subr.mxu0 0.0
    %91 = vmatpush1.msra.mxu0 %v41
    %92 = vmatprep.subr.mxu0 0.0
    %93 = vmatpush1.msra.mxu0 %v42
    %94 = vmatprep.subr.mxu0 0.0
    %95 = vmatpush1.msra.mxu0 0.0
    %96 = vmatprep.subr.mxu0 0.0
    %97 = vmatpush1.msra.mxu0 0.0
    %98 = vmatprep.subr.mxu0 0.0
    %99 = vmatpush1.msra.mxu0 0.0
    %100 = vmatprep.subr.mxu0 0.0
    %101 = vmatpush1.msra.mxu0 0.0
    %102 = vmatprep.subr.mxu0 0.0
    %103 = vmatpush1.msra.mxu0 0.0
    %104 = vmatprep.subr.mxu0 0.0
    %105 = vmatpush1.msra.mxu0 0.0
    %106 = vmatprep.subr.mxu0 0.0
    %107 = vmatpush1.msra.mxu0 0.0
    %108 = vmatprep.subr.mxu0 0.0
    %109 = vmatpush1.msra.mxu0 0.0
    %110 = vmatprep.subr.mxu0 0.0
    %111 = vmatpush1.msra.mxu0 0.0
    %112 = vmatprep.subr.mxu0 0.0
    %113 = vmatpush1.msra.mxu0 0.0
    %114 = vmatprep.subr.mxu0 0.0
    %115 = vmatpush1.msra.mxu0 0.0
    %116 = vmatprep.subr.mxu0 0.0
    %117 = vmatpush1.msra.mxu0 0.0
    %118 = vmatprep.mubr.f32.mxu0 %v52
    %119 = vmatmul.mubr.f32.gmra.mrb[0].mxu0 %v21
    %v120 = vpop.f32.mrb[0].mxu0
    %v121 = vadd.f32 %v48, %v120
    %v122 = vpop.f32.mrb[0].mxu0
    %123 = vdwg.mxu0
    %v124 = vmax.f32 %v121, 0.0
    %v125 = vld [vmem:[%s3] sm:$0xff]
    %v126 = vld [vmem:[%s3 + $0x8] sm:$0xff]
    %v127 = vld [vmem:[%s3 + $0x10] sm:$0xff]
    %v128 = vld [vmem:[%s3 + $0x18] sm:$0xff]
    %v129 = vld [vmem:[%s4] sm:$0x1]
    %v131 = vlaneseq
    %v132 = vshrl.u32 %v131, 7
    %v133 = vsub.s32 0, %v132
    %v134 = vrot.slane %v129, %v133
    %v137 = vsel %vm50, %v124, 0
    %139 = vmatprep.subr.mxu0 0.0
    %140 = vmatpush1.msra.mxu0 %v125
    %141 = vmatprep.subr.mxu0 0.0
    %142 = vmatpush1.msra.mxu0 %v126
    %143 = vmatprep.subr.mxu0 0.0
    %144 = vmatpush1.msra.mxu0 %v127
    %145 = vmatprep.subr.mxu0 0.0
    %146 = vmatpush1.msra.mxu0 %v128
    %147 = vmatprep.subr.mxu0 0.0
    %148 = vmatpush1.msra.mxu0 0.0
    %149 = vmatprep.subr.mxu0 0.0
    %150 = vmatpush1.msra.mxu0 0.0
    %151 = vmatprep.subr.mxu0 0.0
    %152 = vmatpush1.msra.mxu0 0.0
    %153 = vmatprep.subr.mxu0 0.0
    %154 = vmatpush1.msra.mxu0 0.0
    %155 = vmatprep.subr.mxu0 0.0
    %156 = vmatpush1.msra.mxu0 0.0
    %157 = vmatprep.subr.mxu0 0.0
    %158 = vmatpush1.msra.mxu0 0.0
    %159 = vmatprep.subr.mxu0 0.0
    %160 = vmatpush1.msra.mxu0 0.0
    %161 = vmatprep.subr.mxu0 0.0
    %162 = vmatpush1.msra.mxu0 0.0
    %163 = vmatprep.subr.mxu0 0.0
    %164 = vmatpush1.msra.mxu0 0.0
    %165 = vmatprep.subr.mxu0 0.0
    %166 = vmatpush1.msra.mxu0 0.0
    %167 = vmatprep.subr.mxu0 0.0
    %168 = vmatpush1.msra.mxu0 0.0
    %169 = vmatprep.subr.mxu0 0.0
    %170 = vmatpush1.msra.mxu0 0.0
    %171 = vmatprep.subr.mxu0 0.0
    %172 = vmatpush1.msra.mxu0 0.0
    %173 = vmatprep.subr.mxu0 0.0
    %174 = vmatpush1.msra.mxu0 0.0
    %175 = vmatprep.subr.mxu0 0.0
    %176 = vmatpush1.msra.mxu0 0.0
    %177 = vmatprep.subr.mxu0 0.0
    %178 = vmatpush1.msra.mxu0 0.0
    %179 = vmatprep.subr.mxu0 0.0
    %180 = vmatpush1.msra.mxu0 0.0
    %181 = vmatprep.subr.mxu0 0.0
    %182 = vmatpush1.msra.mxu0 0.0
    %183 = vmatprep.subr.mxu0 0.0
    %184 = vmatpush1.msra.mxu0 0.0
    %185 = vmatprep.subr.mxu0 0.0
    %186 = vmatpush1.msra.mxu0 0.0
    %187 = vmatprep.subr.mxu0 0.0
    %188 = vmatpush1.msra.mxu0 0.0
    %189 = vmatprep.subr.mxu0 0.0
    %190 = vmatpush1.msra.mxu0 0.0
    %191 = vmatprep.subr.mxu0 0.0
    %192 = vmatpush1.msra.mxu0 0.0
    %193 = vmatprep.subr.mxu0 0.0
    %194 = vmatpush1.msra.mxu0 0.0
    %195 = vmatprep.subr.mxu0 0.0
    %196 = vmatpush1.msra.mxu0 0.0
    %197 = vmatprep.subr.mxu0 0.0
    %198 = vmatpush1.msra.mxu0 0.0
    %199 = vmatprep.subr.mxu0 0.0
    %200 = vmatpush1.msra.mxu0 0.0
    %201 = vmatprep.subr.mxu0 0.0
    %202 = vmatpush1.msra.mxu0 0.0
    %203 = vmatprep.mubr.f32.mxu0 0.0
    %204 = vmatmul.mubr.f32.gmra.mrb[0].mxu0 %v137
    %v205 = vpop.f32.mrb[0].mxu0
    %v206 = vadd.f32 %v134, %v205
    %v207 = vpop.f32.mrb[0].mxu0
    %208 = vdwg.mxu0
    %v209 = vxor.u32 %v206, 2147483648
    %v210 = vmul.f32 %v209, 1.442695
    %v211 = vpow.pop %v210
    %v212 = vadd.f32 %v211, 1.0
    %v213 = vrcp.pop %v212
    %v214 = vmul.f32 1.0, %v213
    %215 = vst [vmem:[#allocation2] sm:$0xff] %v214
    // Predicated region
    $region22: #{final_net_forward.1} parent=1 // pred_check
      _
    $region23: #{final_net_forward.1} parent=1 // pred_check_branch
      %217 = sbr.rel (0) target = $region25
    $region24: #{final_net_forward.1} parent=1 // pred_region
      %s219 = ssub.s32 128, 128
      %220 = vsyncadd [#allocation3], %s219
      %s222 = sshll.u32 [#allocation2], 4
      %s223 = int_to_ptr.vmem [resolvable:$true] %s222
      %225 = dma.vmem_to_hbm [thread:$0]  %s223, 128, %s5, [#allocation3]
    $region25: #{final_net_forward.1} parent=1 // pred_fallthru
      _
    // Predicated region
    $region26: #{final_net_forward.1} parent=1 // pred_check
      _
    $region27: #{final_net_forward.1} parent=1 // pred_check_branch
      %227 = sbr.rel (0) target = $region29
    $region28: #{final_net_forward.1} parent=1 // pred_region
      %228 = dma.done [#allocation3], 128
    $region29: #{final_net_forward.1} parent=1 // pred_fallthru
      _
    %229 = vsyncpa [#allocation3], 1

</llo_original>
